<compile_context>
chip_gen: v5e
topology: v5e:2x2
jax: 0.10.0
libtpu: 0.0.40
codegen_flags: <defaults>
</compile_context>

<pallas_src>
import jax
import jax.numpy as jnp
from jax.experimental import pallas as pl
from jax.experimental.pallas import tpu as pltpu


def _round_up(x, m):
    return ((x + m - 1) // m) * m


def _compare_kernel(a_ref, beta_ref, b_ref, alpha_ref,
                    w1_ref, w2_ref, bias_ref, va_ref, vb_ref):
    # a/beta/b/alpha tiles: (TILE_M, E); w1/w2: (E, H); bias: (1, H);
    # va/vb tiles: (TILE_M, H).  Computes ReLU(x1 @ W_top + x2 @ W_bot + b).
    w1 = w1_ref[...]
    w2 = w2_ref[...]
    bias = bias_ref[...]

    ya = (jnp.dot(a_ref[...], w1, preferred_element_type=jnp.float32)
          + jnp.dot(beta_ref[...], w2, preferred_element_type=jnp.float32)
          + bias)
    va_ref[...] = jnp.maximum(ya, 0.0).astype(va_ref.dtype)

    yb = (jnp.dot(b_ref[...], w1, preferred_element_type=jnp.float32)
          + jnp.dot(alpha_ref[...], w2, preferred_element_type=jnp.float32)
          + bias)
    vb_ref[...] = jnp.maximum(yb, 0.0).astype(vb_ref.dtype)


def _vmem_budget_bytes():
    """Per-chip VMEM budget: ~75% of physical (48 MiB on v7x, 96 MiB on v5e/v6e)."""
    cap = None
    try:
        cap = getattr(pltpu.get_tpu_info(), "vmem_capacity_bytes", None)
    except Exception:
        cap = None
    if not cap:
        cap = 64 * 1024 * 1024          # conservative default (v7x per-TC)
    return int(min(cap * 3 // 4, 100 * 1024 * 1024))


def _vmem_footprint_bytes(tile_m, emb, hid):
    """Worst-case pipelined VMEM use for one grid step (f32, lane-padded)."""
    emb_v = _round_up(emb, 128)
    hid_v = _round_up(hid, 128)
    act = 2 * 4 * tile_m * emb_v * 4        # 4 double-buffered activation inputs
    out = 2 * 2 * tile_m * hid_v * 4        # 2 double-buffered outputs
    wts = 2 * (2 * emb_v * hid_v * 4)       # w1, w2 (counted double-buffered)
    bia = 2 * hid_v * 4
    return act + out + wts + bia


def compare_forward(A, B, beta, alpha, W, bias, *, tile_m_max=1024):
    """Pallas implementation of Compare.forward (eval mode).

    A, B, beta, alpha: (batch, seq, embed) float32
    W: (2*embed, hidden) float32   (torch Linear weight, transposed)
    bias: (hidden,) float32
    Returns (V_A, V_B), each (batch, seq, hidden).
    """
    bsz, seq, emb = A.shape
    two_e, hid = W.shape
    assert two_e == 2 * emb, "W must have shape (2*embed, hidden)"
    m = bsz * seq

    # Fuse the feature-dim concat: cat([x1, x2]) @ W == x1 @ W[:E] + x2 @ W[E:].
    w1 = W[:emb]
    w2 = W[emb:]
    b2d = bias.reshape(1, hid)

    # Flatten (B, S) -> M rows (contiguous reshape, no HBM round trip).
    a2 = A.reshape(m, emb)
    b2 = B.reshape(m, emb)
    beta2 = beta.reshape(m, emb)
    alpha2 = alpha.reshape(m, emb)

    # --- Row-tile selection -------------------------------------------------
    # Multiple of 8 (sublane constraint); at most ceil(m/2) so the "parallel"
    # grid axis has >= 2 steps whenever m allows (feeds both v7x TensorCores);
    # shrunk until the pipelined VMEM footprint fits the per-chip budget.
    vmem_budget = _vmem_budget_bytes()
    tile_m = min(tile_m_max, max(8, _round_up((m + 1) // 2, 8)))
    while tile_m > 8 and _vmem_footprint_bytes(tile_m, emb, hid) > vmem_budget:
        tile_m = max(8, _round_up(tile_m // 2, 8))

    grid = (pl.cdiv(m, tile_m),)            # ragged last tile handled by masking

    # Activation tiles step along rows; weights/bias are grid-invariant so they
    # stay VMEM-resident (constant index_map -> no re-DMA across row tiles).
    x_spec = pl.BlockSpec((tile_m, emb), lambda i: (i, 0))
    w_spec = pl.BlockSpec((emb, hid), lambda i: (0, 0))
    b_spec = pl.BlockSpec((1, hid), lambda i: (0, 0))
    # Output block's last dim == full hidden dim: no 128-padding, so HBM write
    # traffic is exactly m*hid*4 bytes per output and no epilogue slice is needed.
    o_spec = pl.BlockSpec((tile_m, hid), lambda i: (i, 0))

    flops = 8 * m * emb * hid               # 4 dots of (m, E) @ (E, H)
    bytes_accessed = (4 * m * emb + 2 * emb * hid + hid + 2 * m * hid) * 4
    cost = pl.CostEstimate(flops=flops, transcendentals=0,
                           bytes_accessed=bytes_accessed)

    va, vb = pl.pallas_call(
        _compare_kernel,
        out_shape=(jax.ShapeDtypeStruct((m, hid), jnp.float32),
                   jax.ShapeDtypeStruct((m, hid), jnp.float32)),
        grid_spec=pltpu.PrefetchScalarGridSpec(
            num_scalar_prefetch=0,
            grid=grid,
            in_specs=[x_spec, x_spec, x_spec, x_spec, w_spec, w_spec, b_spec],
            out_specs=(o_spec, o_spec),
        ),
        compiler_params=pltpu.CompilerParams(
            dimension_semantics=("parallel",),   # shards row tiles across v7x TCs
            vmem_limit_bytes=vmem_budget,
        ),
        cost_estimate=cost,
    )(a2, beta2, b2, alpha2, w1, w2, b2d)

    # Contiguous reshapes only — no slicing, no extra HBM passes.
    return va.reshape(bsz, seq, hid), vb.reshape(bsz, seq, hid)


def _reference(A, B, beta, alpha, W, bias):
    ref_VA = jnp.maximum(jnp.concatenate([A, beta], axis=2) @ W + bias, 0.0)
    ref_VB = jnp.maximum(jnp.concatenate([B, alpha], axis=2) @ W + bias, 0.0)
    return ref_VA, ref_VB


def _make_inputs(key, batch, seq, embed, hidden):
    kA, kB, kbeta, kalpha, kW, kb = jax.random.split(key, 6)
    A = jax.random.normal(kA, (batch, seq, embed), dtype=jnp.float32)
    B = jax.random.normal(kB, (batch, seq, embed), dtype=jnp.float32)
    beta = jax.random.normal(kbeta, (batch, seq, embed), dtype=jnp.float32)
    alpha = jax.random.normal(kalpha, (batch, seq, embed), dtype=jnp.float32)
    fan_in = 2 * embed
    bound = 1.0 / (fan_in ** 0.5)
    W = jax.random.uniform(kW, (fan_in, hidden), dtype=jnp.float32,
                           minval=-bound, maxval=bound)
    bias = jax.random.uniform(kb, (hidden,), dtype=jnp.float32,
                              minval=-bound, maxval=bound)
    return A, B, beta, alpha, W, bias


if __name__ == "__main__":
    key = jax.random.PRNGKey(0)
    k1, k2 = jax.random.split(key)

    # Small shapes consistent with the module: num_inputs = 2*embed, hidden = num_hiddens.
    A, B, beta, alpha, W, bias = _make_inputs(k1, batch=2, seq=8, embed=32, hidden=32)
    V_A, V_B = compare_forward(A, B, beta, alpha, W, bias)
    jax.block_until_ready((V_A, V_B))

    ref_VA, ref_VB = _reference(A, B, beta, alpha, W, bias)
    assert V_A.shape == ref_VA.shape and V_B.shape == ref_VB.shape
    assert jnp.allclose(V_A, ref_VA, atol=1e-4, rtol=1e-4)
    assert jnp.allclose(V_B, ref_VB, atol=1e-4, rtol=1e-4)

    # Second check exercising the ragged last row tile (m = 15 not a multiple of
    # the tile) and a hidden dim that is neither 8- nor 128-aligned.
    A2, B2, beta2, alpha2, W2, bias2 = _make_inputs(k2, batch=3, seq=5, embed=32, hidden=48)
    V_A2, V_B2 = compare_forward(A2, B2, beta2, alpha2, W2, bias2)
    jax.block_until_ready((V_A2, V_B2))

    ref_VA2, ref_VB2 = _reference(A2, B2, beta2, alpha2, W2, bias2)
    assert V_A2.shape == ref_VA2.shape and V_B2.shape == ref_VB2.shape
    assert jnp.allclose(V_A2, ref_VA2, atol=1e-4, rtol=1e-4)
    assert jnp.allclose(V_B2, ref_VB2, atol=1e-4, rtol=1e-4)

    print("KERNEL_OK")
</pallas_src>

<mosaic_0001>
module attributes {stable_mosaic.version = 11 : i64} {
  func.func @_compare_kernel(%arg0: i32, %arg1: memref<8x32xf32, #tpu.memory_space<vmem>>, %arg2: memref<8x32xf32, #tpu.memory_space<vmem>>, %arg3: memref<8x32xf32, #tpu.memory_space<vmem>>, %arg4: memref<8x32xf32, #tpu.memory_space<vmem>>, %arg5: memref<32x32xf32, #tpu.memory_space<vmem>>, %arg6: memref<32x32xf32, #tpu.memory_space<vmem>>, %arg7: memref<1x32xf32, #tpu.memory_space<vmem>>, %arg8: memref<8x32xf32, #tpu.memory_space<vmem>>, %arg9: memref<8x32xf32, #tpu.memory_space<vmem>>) attributes {dimension_semantics = [#tpu.dimension_semantics<parallel>], iteration_bounds = array<i64: 2>, scalar_prefetch = 0 : i64, scratch_operands = 0 : i64, tpu.core_type = #tpu.core_type<tc>, window_params = [{transform_indices = @transform_0, window_bounds = array<i64: 8, 32>}, {transform_indices = @transform_1, window_bounds = array<i64: 8, 32>}, {transform_indices = @transform_2, window_bounds = array<i64: 8, 32>}, {transform_indices = @transform_3, window_bounds = array<i64: 8, 32>}, {pipeline_mode = #tpu.pipeline_mode<synchronous>, transform_indices = @transform_4, window_bounds = array<i64: 32, 32>}, {pipeline_mode = #tpu.pipeline_mode<synchronous>, transform_indices = @transform_5, window_bounds = array<i64: 32, 32>}, {pipeline_mode = #tpu.pipeline_mode<synchronous>, transform_indices = @transform_6, window_bounds = array<i64: 1, 32>}, {transform_indices = @transform_7, window_bounds = array<i64: 8, 32>}, {transform_indices = @transform_8, window_bounds = array<i64: 8, 32>}]} {
    %c0 = arith.constant 0 : index
    %c0_0 = arith.constant 0 : index
    %0 = vector.load %arg5[%c0, %c0_0] : memref<32x32xf32, #tpu.memory_space<vmem>>, vector<32x32xf32>
    %c0_1 = arith.constant 0 : index
    %c0_2 = arith.constant 0 : index
    %1 = vector.load %arg6[%c0_1, %c0_2] : memref<32x32xf32, #tpu.memory_space<vmem>>, vector<32x32xf32>
    %c0_3 = arith.constant 0 : index
    %c0_4 = arith.constant 0 : index
    %2 = vector.load %arg7[%c0_3, %c0_4] : memref<1x32xf32, #tpu.memory_space<vmem>>, vector<1x32xf32>
    %c0_5 = arith.constant 0 : index
    %c0_6 = arith.constant 0 : index
    %3 = vector.load %arg1[%c0_5, %c0_6] : memref<8x32xf32, #tpu.memory_space<vmem>>, vector<8x32xf32>
    %cst = arith.constant dense<0.000000e+00> : vector<8x32xf32>
    %4 = tpu.matmul %3, %0, %cst {dimension_numbers = #tpu.dot_dimension_numbers<[1], [0], [0], [1], [0, 0, 1, 1], [], []>} : vector<8x32xf32>, vector<32x32xf32>, vector<8x32xf32> -> vector<8x32xf32>
    %c0_7 = arith.constant 0 : index
    %c0_8 = arith.constant 0 : index
    %5 = vector.load %arg2[%c0_7, %c0_8] : memref<8x32xf32, #tpu.memory_space<vmem>>, vector<8x32xf32>
    %cst_9 = arith.constant dense<0.000000e+00> : vector<8x32xf32>
    %6 = tpu.matmul %5, %1, %cst_9 {dimension_numbers = #tpu.dot_dimension_numbers<[1], [0], [0], [1], [0, 0, 1, 1], [], []>} : vector<8x32xf32>, vector<32x32xf32>, vector<8x32xf32> -> vector<8x32xf32>
    %7 = arith.addf %4, %6 : vector<8x32xf32>
    %8 = vector.broadcast %2 : vector<1x32xf32> to vector<8x32xf32>
    %9 = arith.addf %7, %8 : vector<8x32xf32>
    %cst_10 = arith.constant 0.000000e+00 : f32
    %10 = vector.broadcast %cst_10 : f32 to vector<8x32xf32>
    %11 = arith.maximumf %9, %10 : vector<8x32xf32>
    %c0_11 = arith.constant 0 : index
    %c0_12 = arith.constant 0 : index
    %12 = vector.load %arg8[%c0_11, %c0_12] : memref<8x32xf32, #tpu.memory_space<vmem>>, vector<8x32xf32>
    tpu.vector_store %arg8[%c0_11, %c0_12], %11 {strides = array<i32>} : memref<8x32xf32, #tpu.memory_space<vmem>>, vector<8x32xf32>,
    %c0_13 = arith.constant 0 : index
    %c0_14 = arith.constant 0 : index
    %13 = vector.load %arg3[%c0_13, %c0_14] : memref<8x32xf32, #tpu.memory_space<vmem>>, vector<8x32xf32>
    %cst_15 = arith.constant dense<0.000000e+00> : vector<8x32xf32>
    %14 = tpu.matmul %13, %0, %cst_15 {dimension_numbers = #tpu.dot_dimension_numbers<[1], [0], [0], [1], [0, 0, 1, 1], [], []>} : vector<8x32xf32>, vector<32x32xf32>, vector<8x32xf32> -> vector<8x32xf32>
    %c0_16 = arith.constant 0 : index
    %c0_17 = arith.constant 0 : index
    %15 = vector.load %arg4[%c0_16, %c0_17] : memref<8x32xf32, #tpu.memory_space<vmem>>, vector<8x32xf32>
    %cst_18 = arith.constant dense<0.000000e+00> : vector<8x32xf32>
    %16 = tpu.matmul %15, %1, %cst_18 {dimension_numbers = #tpu.dot_dimension_numbers<[1], [0], [0], [1], [0, 0, 1, 1], [], []>} : vector<8x32xf32>, vector<32x32xf32>, vector<8x32xf32> -> vector<8x32xf32>
    %17 = arith.addf %14, %16 : vector<8x32xf32>
    %18 = vector.broadcast %2 : vector<1x32xf32> to vector<8x32xf32>
    %19 = arith.addf %17, %18 : vector<8x32xf32>
    %cst_19 = arith.constant 0.000000e+00 : f32
    %20 = vector.broadcast %cst_19 : f32 to vector<8x32xf32>
    %21 = arith.maximumf %19, %20 : vector<8x32xf32>
    %c0_20 = arith.constant 0 : index
    %c0_21 = arith.constant 0 : index
    %22 = vector.load %arg9[%c0_20, %c0_21] : memref<8x32xf32, #tpu.memory_space<vmem>>, vector<8x32xf32>
    tpu.vector_store %arg9[%c0_20, %c0_21], %21 {strides = array<i32>} : memref<8x32xf32, #tpu.memory_space<vmem>>, vector<8x32xf32>,
    return
  }
  func.func @transform_0(%arg0: i32) -> (i32, i32) {
    %c0_i32 = arith.constant 0 : i32
    %c0_i32_0 = arith.constant 0 : i32
    return %arg0, %c0_i32 : i32, i32
  }
  func.func @transform_1(%arg0: i32) -> (i32, i32) {
    %c0_i32 = arith.constant 0 : i32
    %c0_i32_0 = arith.constant 0 : i32
    return %arg0, %c0_i32 : i32, i32
  }
  func.func @transform_2(%arg0: i32) -> (i32, i32) {
    %c0_i32 = arith.constant 0 : i32
    %c0_i32_0 = arith.constant 0 : i32
    return %arg0, %c0_i32 : i32, i32
  }
  func.func @transform_3(%arg0: i32) -> (i32, i32) {
    %c0_i32 = arith.constant 0 : i32
    %c0_i32_0 = arith.constant 0 : i32
    return %arg0, %c0_i32 : i32, i32
  }
  func.func @transform_4(%arg0: i32) -> (i32, i32) {
    %c0_i32 = arith.constant 0 : i32
    %c0_i32_0 = arith.constant 0 : i32
    %c0_i32_1 = arith.constant 0 : i32
    return %c0_i32, %c0_i32_0 : i32, i32
  }
  func.func @transform_5(%arg0: i32) -> (i32, i32) {
    %c0_i32 = arith.constant 0 : i32
    %c0_i32_0 = arith.constant 0 : i32
    %c0_i32_1 = arith.constant 0 : i32
    return %c0_i32, %c0_i32_0 : i32, i32
  }
  func.func @transform_6(%arg0: i32) -> (i32, i32) {
    %c0_i32 = arith.constant 0 : i32
    %c0_i32_0 = arith.constant 0 : i32
    %c0_i32_1 = arith.constant 0 : i32
    return %c0_i32, %c0_i32_0 : i32, i32
  }
  func.func @transform_7(%arg0: i32) -> (i32, i32) {
    %c0_i32 = arith.constant 0 : i32
    %c0_i32_0 = arith.constant 0 : i32
    return %arg0, %c0_i32 : i32, i32
  }
  func.func @transform_8(%arg0: i32) -> (i32, i32) {
    %c0_i32 = arith.constant 0 : i32
    %c0_i32_0 = arith.constant 0 : i32
    return %arg0, %c0_i32 : i32, i32
  }
}

</mosaic_0001>

<llo_original>
// kernel: tpu_custom_call.1
$region0: #{tpu_custom_call.1}
  #allocation0 [shape = 'u32[]', space=smem, size = 0x4, offset = 0x4, fixed_abs, tag = 'smem constant byte address 0x4 - core index']
  #allocation1 [shape = 'u32[72,128]{1,0:T(1,128)}', space=vmem, size = 0x9000, scoped, tag = 'internal scratch']
  %s0 = inlined_call_operand.hbm [shape: f32[16,32], index: 0, kind: input, shape index: {}]
  %s1 = inlined_call_operand.hbm [shape: f32[16,32], index: 1, kind: input, shape index: {}]
  %s2 = inlined_call_operand.hbm [shape: f32[16,32], index: 2, kind: input, shape index: {}]
  %s3 = inlined_call_operand.hbm [shape: f32[16,32], index: 3, kind: input, shape index: {}]
  %s4 = inlined_call_operand.hbm [shape: f32[32,32], index: 4, kind: input, shape index: {}]
  %s5 = inlined_call_operand.hbm [shape: f32[32,32], index: 5, kind: input, shape index: {}]
  %s6 = inlined_call_operand.vmem [shape: f32[1,32], index: 6, kind: input, shape index: {}]
  %s7 = inlined_call_operand.hbm [shape: f32[16,32], index: 7, kind: output, shape index: {0}]
  %s8 = inlined_call_operand.hbm [shape: f32[16,32], index: 8, kind: output, shape index: {1}]
  %9 = xla_tuple %s7, %s8
  %s10 = sld [smem:[#allocation0]]
  $region93: #{tpu_custom_call.1} parent=0
    _
  %s12 = ssub.s32 1, %s10
  %s13 = scalar_select 0, %s12, %s10
  $region1: #{tpu_custom_call.1} parent=0
    #allocation2 [shape = 'u8[8192]{0}', space=vmem, size = 0x2000, scoped, tag = 'input window, operand 0']
    #allocation3 [shape = 's32[2]{0}', space=sflag, size = 0x8, scoped, tag = 'scoped memory for tpu_custom_call.1']
    #allocation4 [shape = 's32[2]{0}', space=sflag, size = 0x8, scoped, tag = 'scoped memory for tpu_custom_call.1']
    #allocation5 [shape = 'u8[8192]{0}', space=vmem, size = 0x2000, scoped, tag = 'input window, operand 1']
    #allocation6 [shape = 's32[2]{0}', space=sflag, size = 0x8, scoped, tag = 'scoped memory for tpu_custom_call.1']
    #allocation7 [shape = 'u8[8192]{0}', space=vmem, size = 0x2000, scoped, tag = 'input window, operand 2']
    #allocation8 [shape = 'u8[8192]{0}', space=vmem, size = 0x2000, scoped, tag = 'input window, operand 3']
    #allocation9 [shape = 's32[2]{0}', space=sflag, size = 0x8, scoped, tag = 'scoped memory for tpu_custom_call.1']
    #allocation10 [shape = 'u8[16384]{0}', space=vmem, size = 0x4000, scoped, tag = 'input window, operand 4, single buffered']
    #allocation11 [shape = 'u8[16384]{0}', space=vmem, size = 0x4000, scoped, tag = 'input window, operand 5, single buffered']
    #allocation12 [shape = 's32[1]{0}', space=sflag, size = 0x4, scoped, tag = 'scoped memory for tpu_custom_call.1']
    #allocation13 [shape = 'u8[8192]{0}', space=vmem, size = 0x2000, scoped, tag = 'output window, operand 0']
    #allocation14 [shape = 'u8[8192]{0}', space=vmem, size = 0x2000, scoped, tag = 'output window, operand 1']
    #allocation15 [shape = 's32[2]{0}', space=sflag, size = 0x8, scoped, tag = 'scoped memory for tpu_custom_call.1']
    %14 = vsyncpa [#allocation3], 0
    %s15 = scalar_lea.sflag [#allocation3], 1
    %16 = vsyncpa %s15, 0
    %17 = vsyncpa [#allocation6], 0
    %s18 = scalar_lea.sflag [#allocation6], 1
    %19 = vsyncpa %s18, 0
    %20 = vsyncpa [#allocation9], 0
    %s21 = scalar_lea.sflag [#allocation9], 1
    %22 = vsyncpa %s21, 0
    %23 = vsyncpa [#allocation12], 0
    %24 = vsyncpa [#allocation4], 0
    %s25 = scalar_lea.sflag [#allocation4], 1
    %26 = vsyncpa %s25, 0
    %27 = vsyncpa [#allocation15], 0
    %s28 = scalar_lea.sflag [#allocation15], 1
    %29 = vsyncpa %s28, 0
    loop: start=0, step=1, limit=4
    $region2: #{tpu_custom_call.1} parent=1 // loop_pre_header
      _
    $region3: #{tpu_custom_call.1} parent=1 // loop_header
      %s31 = sphi 0, %s35
      %p32 = scmp.ge.s32.totalorder %s31, 4
      %s41 = sphi 0, %s43
      %s44 = sphi 0, %s41
      %s45 = sphi 0, %s44
      %s61 = sphi 0, %s45
      %s67 = sphi 0, %s69
      %s70 = sphi 0, %s67
      %s71 = sphi 0, %s70
      %s87 = sphi 0, %s71
      %s93 = sphi 0, %s95
      %s96 = sphi 0, %s93
      %s97 = sphi 0, %s96
      %s113 = sphi 0, %s97
      %s119 = sphi 0, %s121
      %s122 = sphi 0, %s119
      %s123 = sphi 0, %s122
      %s139 = sphi 0, %s123
      %s143 = sphi 0, %s143
      %s145 = sphi 0, %s143
      %s146 = sphi 0, %s145
      %s160 = sphi 0, %s146
      %s164 = sphi 0, %s164
      %s166 = sphi 0, %s164
      %s167 = sphi 0, %s166
      %s181 = sphi 0, %s167
      %s185 = sphi 0, %s185
      %s187 = sphi 0, %s185
      %s188 = sphi 0, %s187
      %s202 = sphi 0, %s188
      %s208 = sphi 0, %s210
      %s211 = sphi 0, %s208
      %s212 = sphi 0, %s211
      %s228 = sphi 0, %s212
      %s234 = sphi 0, %s236
      %s237 = sphi 0, %s234
      %s238 = sphi 0, %s237
      %s254 = sphi 0, %s238
    $region4: #{tpu_custom_call.1} parent=1 // loop_header_branch
      %34 = sbr.rel (%p32) target = $region8
    $region5: #{tpu_custom_call.1} parent=1 // loop_body
      %s36 = ssub.s32 %s31, 1
      %s37 = ssub.s32 %s31, 2
      %s38 = sadd.s32 %s31, 1
      %s39 = ssub.s32 %s31, %s38
      %p40 = scmp.eq.s32.totalorder %s39, 0
      %s42 = sadd.s32 %s41, 1
      %s43 = scalar_select %p40, %s41, %s42
      %p46 = pneg %p40
      %p47 = scmp.eq.s32.totalorder %s31, 1
      %p48 = por %p46, %p47
      %p49 = scmp.ne.s32.totalorder %s41, %s44
      %p50 = scmp.eq.s32.totalorder %s31, 0
      %p51 = por %p49, %p50
      %p52 = scmp.ne.s32.totalorder %s41, %s44
      %p53 = scmp.eq.s32.totalorder %s36, 1
      %p54 = por %p52, %p53
      %p55 = scmp.ne.s32.totalorder %s44, %s45
      %p56 = scmp.eq.s32.totalorder %s36, 0
      %p57 = por %p55, %p56
      %p58 = scmp.ne.s32.totalorder %s44, %s45
      %p59 = scmp.eq.s32.totalorder %s37, 1
      %p60 = por %p58, %p59
      %p62 = scmp.ne.s32.totalorder %s45, %s61
      %p63 = scmp.eq.s32.totalorder %s37, 0
      %p64 = por %p62, %p63
      %s65 = ssub.s32 %s31, %s38
      %p66 = scmp.eq.s32.totalorder %s65, 0
      %s68 = sadd.s32 %s67, 1
      %s69 = scalar_select %p66, %s67, %s68
      %p72 = pneg %p66
      %p73 = scmp.eq.s32.totalorder %s31, 1
      %p74 = por %p72, %p73
      %p75 = scmp.ne.s32.totalorder %s67, %s70
      %p76 = scmp.eq.s32.totalorder %s31, 0
      %p77 = por %p75, %p76
      %p78 = scmp.ne.s32.totalorder %s67, %s70
      %p79 = scmp.eq.s32.totalorder %s36, 1
      %p80 = por %p78, %p79
      %p81 = scmp.ne.s32.totalorder %s70, %s71
      %p82 = scmp.eq.s32.totalorder %s36, 0
      %p83 = por %p81, %p82
      %p84 = scmp.ne.s32.totalorder %s70, %s71
      %p85 = scmp.eq.s32.totalorder %s37, 1
      %p86 = por %p84, %p85
      %p88 = scmp.ne.s32.totalorder %s71, %s87
      %p89 = scmp.eq.s32.totalorder %s37, 0
      %p90 = por %p88, %p89
      %s91 = ssub.s32 %s31, %s38
      %p92 = scmp.eq.s32.totalorder %s91, 0
      %s94 = sadd.s32 %s93, 1
      %s95 = scalar_select %p92, %s93, %s94
      %p98 = pneg %p92
      %p99 = scmp.eq.s32.totalorder %s31, 1
      %p100 = por %p98, %p99
      %p101 = scmp.ne.s32.totalorder %s93, %s96
      %p102 = scmp.eq.s32.totalorder %s31, 0
      %p103 = por %p101, %p102
      %p104 = scmp.ne.s32.totalorder %s93, %s96
      %p105 = scmp.eq.s32.totalorder %s36, 1
      %p106 = por %p104, %p105
      %p107 = scmp.ne.s32.totalorder %s96, %s97
      %p108 = scmp.eq.s32.totalorder %s36, 0
      %p109 = por %p107, %p108
      %p110 = scmp.ne.s32.totalorder %s96, %s97
      %p111 = scmp.eq.s32.totalorder %s37, 1
      %p112 = por %p110, %p111
      %p114 = scmp.ne.s32.totalorder %s97, %s113
      %p115 = scmp.eq.s32.totalorder %s37, 0
      %p116 = por %p114, %p115
      %s117 = ssub.s32 %s31, %s38
      %p118 = scmp.eq.s32.totalorder %s117, 0
      %s120 = sadd.s32 %s119, 1
      %s121 = scalar_select %p118, %s119, %s120
      %p124 = pneg %p118
      %p125 = scmp.eq.s32.totalorder %s31, 1
      %p126 = por %p124, %p125
      %p127 = scmp.ne.s32.totalorder %s119, %s122
      %p128 = scmp.eq.s32.totalorder %s31, 0
      %p129 = por %p127, %p128
      %p130 = scmp.ne.s32.totalorder %s119, %s122
      %p131 = scmp.eq.s32.totalorder %s36, 1
      %p132 = por %p130, %p131
      %p133 = scmp.ne.s32.totalorder %s122, %s123
      %p134 = scmp.eq.s32.totalorder %s36, 0
      %p135 = por %p133, %p134
      %p136 = scmp.ne.s32.totalorder %s122, %s123
      %p137 = scmp.eq.s32.totalorder %s37, 1
      %p138 = por %p136, %p137
      %p140 = scmp.ne.s32.totalorder %s123, %s139
      %p141 = scmp.eq.s32.totalorder %s37, 0
      %p142 = por %p140, %p141
      %s144 = sadd.s32 %s143, 1
      %p147 = scmp.eq.s32.totalorder %s31, 1
      %p148 = scmp.ne.s32.totalorder %s143, %s145
      %p149 = scmp.eq.s32.totalorder %s31, 0
      %p150 = por %p148, %p149
      %p151 = scmp.ne.s32.totalorder %s143, %s145
      %p152 = scmp.eq.s32.totalorder %s36, 1
      %p153 = por %p151, %p152
      %p154 = scmp.ne.s32.totalorder %s145, %s146
      %p155 = scmp.eq.s32.totalorder %s36, 0
      %p156 = por %p154, %p155
      %p157 = scmp.ne.s32.totalorder %s145, %s146
      %p158 = scmp.eq.s32.totalorder %s37, 1
      %p159 = por %p157, %p158
      %p161 = scmp.ne.s32.totalorder %s146, %s160
      %p162 = scmp.eq.s32.totalorder %s37, 0
      %p163 = por %p161, %p162
      %s165 = sadd.s32 %s164, 1
      %p168 = scmp.eq.s32.totalorder %s31, 1
      %p169 = scmp.ne.s32.totalorder %s164, %s166
      %p170 = scmp.eq.s32.totalorder %s31, 0
      %p171 = por %p169, %p170
      %p172 = scmp.ne.s32.totalorder %s164, %s166
      %p173 = scmp.eq.s32.totalorder %s36, 1
      %p174 = por %p172, %p173
      %p175 = scmp.ne.s32.totalorder %s166, %s167
      %p176 = scmp.eq.s32.totalorder %s36, 0
      %p177 = por %p175, %p176
      %p178 = scmp.ne.s32.totalorder %s166, %s167
      %p179 = scmp.eq.s32.totalorder %s37, 1
      %p180 = por %p178, %p179
      %p182 = scmp.ne.s32.totalorder %s167, %s181
      %p183 = scmp.eq.s32.totalorder %s37, 0
      %p184 = por %p182, %p183
      %s186 = sadd.s32 %s185, 1
      %p189 = scmp.eq.s32.totalorder %s31, 1
      %p190 = scmp.ne.s32.totalorder %s185, %s187
      %p191 = scmp.eq.s32.totalorder %s31, 0
      %p192 = por %p190, %p191
      %p193 = scmp.ne.s32.totalorder %s185, %s187
      %p194 = scmp.eq.s32.totalorder %s36, 1
      %p195 = por %p193, %p194
      %p196 = scmp.ne.s32.totalorder %s187, %s188
      %p197 = scmp.eq.s32.totalorder %s36, 0
      %p198 = por %p196, %p197
      %p199 = scmp.ne.s32.totalorder %s187, %s188
      %p200 = scmp.eq.s32.totalorder %s37, 1
      %p201 = por %p199, %p200
      %p203 = scmp.ne.s32.totalorder %s188, %s202
      %p204 = scmp.eq.s32.totalorder %s37, 0
      %p205 = por %p203, %p204
      %s206 = ssub.s32 %s31, %s38
      %p207 = scmp.eq.s32.totalorder %s206, 0
      %s209 = sadd.s32 %s208, 1
      %s210 = scalar_select %p207, %s208, %s209
      %p213 = pneg %p207
      %p214 = scmp.eq.s32.totalorder %s31, 1
      %p215 = por %p213, %p214
      %p216 = scmp.ne.s32.totalorder %s208, %s211
      %p217 = scmp.eq.s32.totalorder %s31, 0
      %p218 = por %p216, %p217
      %p219 = scmp.ne.s32.totalorder %s208, %s211
      %p220 = scmp.eq.s32.totalorder %s36, 1
      %p221 = por %p219, %p220
      %p222 = scmp.ne.s32.totalorder %s211, %s212
      %p223 = scmp.eq.s32.totalorder %s36, 0
      %p224 = por %p222, %p223
      %p225 = scmp.ne.s32.totalorder %s211, %s212
      %p226 = scmp.eq.s32.totalorder %s37, 1
      %p227 = por %p225, %p226
      %p229 = scmp.ne.s32.totalorder %s212, %s228
      %p230 = scmp.eq.s32.totalorder %s37, 0
      %p231 = por %p229, %p230
      %s232 = ssub.s32 %s31, %s38
      %p233 = scmp.eq.s32.totalorder %s232, 0
      %s235 = sadd.s32 %s234, 1
      %s236 = scalar_select %p233, %s234, %s235
      %p239 = pneg %p233
      %p240 = scmp.eq.s32.totalorder %s31, 1
      %p241 = por %p239, %p240
      %p242 = scmp.ne.s32.totalorder %s234, %s237
      %p243 = scmp.eq.s32.totalorder %s31, 0
      %p244 = por %p242, %p243
      %p245 = scmp.ne.s32.totalorder %s234, %s237
      %p246 = scmp.eq.s32.totalorder %s36, 1
      %p247 = por %p245, %p246
      %p248 = scmp.ne.s32.totalorder %s237, %s238
      %p249 = scmp.eq.s32.totalorder %s36, 0
      %p250 = por %p248, %p249
      %p251 = scmp.ne.s32.totalorder %s237, %s238
      %p252 = scmp.eq.s32.totalorder %s37, 1
      %p253 = por %p251, %p252
      %p255 = scmp.ne.s32.totalorder %s238, %s254
      %p256 = scmp.eq.s32.totalorder %s37, 0
      %p257 = por %p255, %p256
      %p258 = scmp.le.s32.totalorder 1, %s31
      %p259 = scmp.lt.s32.totalorder %s31, 3
      %p260 = pnand %p258, %p259
      %p261 = pneg %p260
      // Predicated region
      $region9: #{tpu_custom_call.1} parent=5 // pred_check
        _
      $region10: #{tpu_custom_call.1} parent=5 // pred_check_branch
        %263 = sbr.rel (%p260) target = $region12
      $region11: #{tpu_custom_call.1} parent=5 // pred_region
        %s264 = ssub.s32 %s31, 1
        // Predicated region
        $region13: #{tpu_custom_call.1} parent=11 // pred_check
          %p265 = pneg %p156
        $region14: #{tpu_custom_call.1} parent=11 // pred_check_branch
          %267 = sbr.rel (%p265) target = $region16
        $region15: #{tpu_custom_call.1} parent=11 // pred_region
          %269 = vsyncadd [#allocation9], 0
          %s270 = sshll.u32 %s4, 4
          %s271 = int_to_ptr.hbm [resolvable:$true] %s270
          %s272 = sshll.u32 [#allocation10], 4
          %s273 = int_to_ptr.vmem [resolvable:$true] %s272
          %278 = dma.hbm_to_vmem [thread:$0]  %s271, 512, %s273, [#allocation9], 128, 128, 8
        $region16: #{tpu_custom_call.1} parent=11 // pred_fallthru
          _
        // Predicated region
        $region17: #{tpu_custom_call.1} parent=11 // pred_check
          %p279 = pneg %p177
        $region18: #{tpu_custom_call.1} parent=11 // pred_check_branch
          %281 = sbr.rel (%p279) target = $region20
        $region19: #{tpu_custom_call.1} parent=11 // pred_region
          %283 = vsyncadd [#allocation12], 0
          %s284 = sshll.u32 %s5, 4
          %s285 = int_to_ptr.hbm [resolvable:$true] %s284
          %s286 = sshll.u32 [#allocation11], 4
          %s287 = int_to_ptr.vmem [resolvable:$true] %s286
          %292 = dma.hbm_to_vmem [thread:$0]  %s285, 512, %s287, [#allocation12], 128, 128, 8
        $region20: #{tpu_custom_call.1} parent=11 // pred_fallthru
          _
        // Predicated region
        $region21: #{tpu_custom_call.1} parent=11 // pred_check
          %p293 = pneg %p198
        $region22: #{tpu_custom_call.1} parent=11 // pred_check_branch
          %295 = sbr.rel (%p293) target = $region24
        $region23: #{tpu_custom_call.1} parent=11 // pred_region
          _
        $region24: #{tpu_custom_call.1} parent=11 // pred_fallthru
          _
      $region12: #{tpu_custom_call.1} parent=5 // pred_fallthru
        _
      %p296 = scmp.lt.s32.totalorder %s31, 2
      // Predicated region
      $region25: #{tpu_custom_call.1} parent=5 // pred_check
        %p297 = pneg %p296
      $region26: #{tpu_custom_call.1} parent=5 // pred_check_branch
        %299 = sbr.rel (%p297) target = $region28
      $region27: #{tpu_custom_call.1} parent=5 // pred_region
        // Predicated region
        $region29: #{tpu_custom_call.1} parent=27 // pred_check
          %p300 = pneg %p51
        $region30: #{tpu_custom_call.1} parent=27 // pred_check_branch
          %302 = sbr.rel (%p300) target = $region32
        $region31: #{tpu_custom_call.1} parent=27 // pred_region
          %s303 = sand.u32 %s41, 1
          %s304 = scalar_lea.sflag [#allocation3], %s303
          %s305 = sand.u32 %s41, 1
          %s306 = smul.addr %s305, 8
          %s307 = scalar_lea.vmem [#allocation2], %s306
          %309 = vsyncadd %s304, 0
          %s310 = smul.addr %s31, 8
          %s311 = scalar_lea.hbm %s0, %s310
          %s313 = sshll.u32 %s311, 4
          %s314 = int_to_ptr.hbm [resolvable:$true] %s313
          %s315 = sshll.u32 %s307, 4
          %s316 = int_to_ptr.vmem [resolvable:$true] %s315
          %318 = dma.hbm_to_vmem [thread:$0]  %s314, 128, %s316, %s304
        $region32: #{tpu_custom_call.1} parent=27 // pred_fallthru
          _
        // Predicated region
        $region33: #{tpu_custom_call.1} parent=27 // pred_check
          %p319 = pneg %p77
        $region34: #{tpu_custom_call.1} parent=27 // pred_check_branch
          %321 = sbr.rel (%p319) target = $region36
        $region35: #{tpu_custom_call.1} parent=27 // pred_region
          %s322 = sand.u32 %s31, 1
          %s323 = scalar_lea.sflag [#allocation6], %s322
          %s324 = sand.u32 %s67, 1
          %s325 = smul.addr %s324, 8
          %s326 = scalar_lea.vmem [#allocation5], %s325
          %328 = vsyncadd %s323, 0
          %s329 = smul.addr %s31, 8
          %s330 = scalar_lea.hbm %s1, %s329
          %s332 = sshll.u32 %s330, 4
          %s333 = int_to_ptr.hbm [resolvable:$true] %s332
          %s334 = sshll.u32 %s326, 4
          %s335 = int_to_ptr.vmem [resolvable:$true] %s334
          %337 = dma.hbm_to_vmem [thread:$0]  %s333, 128, %s335, %s323
        $region36: #{tpu_custom_call.1} parent=27 // pred_fallthru
          _
        // Predicated region
        $region37: #{tpu_custom_call.1} parent=27 // pred_check
          %p338 = pneg %p103
        $region38: #{tpu_custom_call.1} parent=27 // pred_check_branch
          %340 = sbr.rel (%p338) target = $region40
        $region39: #{tpu_custom_call.1} parent=27 // pred_region
          %s341 = sand.u32 %s31, 1
          %s342 = scalar_lea.sflag [#allocation6], %s341
          %s343 = sand.u32 %s93, 1
          %s344 = smul.addr %s343, 8
          %s345 = scalar_lea.vmem [#allocation7], %s344
          %347 = vsyncadd %s342, 0
          %s348 = smul.addr %s31, 8
          %s349 = scalar_lea.hbm %s2, %s348
          %s351 = sshll.u32 %s349, 4
          %s352 = int_to_ptr.hbm [resolvable:$true] %s351
          %s353 = sshll.u32 %s345, 4
          %s354 = int_to_ptr.vmem [resolvable:$true] %s353
          %356 = dma.hbm_to_vmem [thread:$0]  %s352, 128, %s354, %s342
        $region40: #{tpu_custom_call.1} parent=27 // pred_fallthru
          _
        // Predicated region
        $region41: #{tpu_custom_call.1} parent=27 // pred_check
          %p357 = pneg %p129
        $region42: #{tpu_custom_call.1} parent=27 // pred_check_branch
          %359 = sbr.rel (%p357) target = $region44
        $region43: #{tpu_custom_call.1} parent=27 // pred_region
          %s360 = sand.u32 %s31, 1
          %s361 = scalar_lea.sflag [#allocation9], %s360
          %s362 = sand.u32 %s119, 1
          %s363 = smul.addr %s362, 8
          %s364 = scalar_lea.vmem [#allocation8], %s363
          %366 = vsyncadd %s361, 0
          %s367 = smul.addr %s31, 8
          %s368 = scalar_lea.hbm %s3, %s367
          %s370 = sshll.u32 %s368, 4
          %s371 = int_to_ptr.hbm [resolvable:$true] %s370
          %s372 = sshll.u32 %s364, 4
          %s373 = int_to_ptr.vmem [resolvable:$true] %s372
          %375 = dma.hbm_to_vmem [thread:$0]  %s371, 128, %s373, %s361
        $region44: #{tpu_custom_call.1} parent=27 // pred_fallthru
          _
      $region28: #{tpu_custom_call.1} parent=5 // pred_fallthru
        _
      %p376 = scmp.le.s32.totalorder 1, %s31
      %p377 = scmp.lt.s32.totalorder %s31, 3
      %p378 = pnand %p376, %p377
      %p379 = pneg %p378
      // Predicated region
      $region45: #{tpu_custom_call.1} parent=5 // pred_check
        _
      $region46: #{tpu_custom_call.1} parent=5 // pred_check_branch
        %381 = sbr.rel (%p378) target = $region48
      $region47: #{tpu_custom_call.1} parent=5 // pred_region
        %s382 = ssub.s32 %s31, 1
        %s383 = sand.u32 %s44, 1
        %s384 = scalar_lea.sflag [#allocation3], %s383
        %s385 = sand.u32 %s44, 1
        %s386 = smul.addr %s385, 8
        %s387 = scalar_lea.vmem [#allocation2], %s386
        // Predicated region
        $region49: #{tpu_custom_call.1} parent=47 // pred_check
          %p388 = pneg %p57
        $region50: #{tpu_custom_call.1} parent=47 // pred_check_branch
          %390 = sbr.rel (%p388) target = $region52
        $region51: #{tpu_custom_call.1} parent=47 // pred_region
          %392 = dma.done %s384, 128
        $region52: #{tpu_custom_call.1} parent=47 // pred_fallthru
          _
        %s393 = sand.u32 %s36, 1
        %s394 = scalar_lea.sflag [#allocation6], %s393
        %s395 = sand.u32 %s70, 1
        %s396 = smul.addr %s395, 8
        %s397 = scalar_lea.vmem [#allocation5], %s396
        // Predicated region
        $region53: #{tpu_custom_call.1} parent=47 // pred_check
          %p398 = pneg %p83
        $region54: #{tpu_custom_call.1} parent=47 // pred_check_branch
          %400 = sbr.rel (%p398) target = $region56
        $region55: #{tpu_custom_call.1} parent=47 // pred_region
          %402 = dma.done %s394, 128
        $region56: #{tpu_custom_call.1} parent=47 // pred_fallthru
          _
        %s403 = sand.u32 %s36, 1
        %s404 = scalar_lea.sflag [#allocation6], %s403
        %s405 = sand.u32 %s96, 1
        %s406 = smul.addr %s405, 8
        %s407 = scalar_lea.vmem [#allocation7], %s406
        // Predicated region
        $region57: #{tpu_custom_call.1} parent=47 // pred_check
          %p408 = pneg %p109
        $region58: #{tpu_custom_call.1} parent=47 // pred_check_branch
          %410 = sbr.rel (%p408) target = $region60
        $region59: #{tpu_custom_call.1} parent=47 // pred_region
          %412 = dma.done %s404, 128
        $region60: #{tpu_custom_call.1} parent=47 // pred_fallthru
          _
        %s413 = sand.u32 %s36, 1
        %s414 = scalar_lea.sflag [#allocation9], %s413
        %s415 = sand.u32 %s122, 1
        %s416 = smul.addr %s415, 8
        %s417 = scalar_lea.vmem [#allocation8], %s416
        // Predicated region
        $region61: #{tpu_custom_call.1} parent=47 // pred_check
          %p418 = pneg %p135
        $region62: #{tpu_custom_call.1} parent=47 // pred_check_branch
          %420 = sbr.rel (%p418) target = $region64
        $region63: #{tpu_custom_call.1} parent=47 // pred_region
          %422 = dma.done %s414, 128
        $region64: #{tpu_custom_call.1} parent=47 // pred_fallthru
          _
        // Predicated region
        $region65: #{tpu_custom_call.1} parent=47 // pred_check
          %p423 = pneg %p156
        $region66: #{tpu_custom_call.1} parent=47 // pred_check_branch
          %425 = sbr.rel (%p423) target = $region68
        $region67: #{tpu_custom_call.1} parent=47 // pred_region
          %427 = dma.done [#allocation9], 512
        $region68: #{tpu_custom_call.1} parent=47 // pred_fallthru
          _
        // Predicated region
        $region69: #{tpu_custom_call.1} parent=47 // pred_check
          %p428 = pneg %p177
        $region70: #{tpu_custom_call.1} parent=47 // pred_check_branch
          %430 = sbr.rel (%p428) target = $region72
        $region71: #{tpu_custom_call.1} parent=47 // pred_region
          %432 = dma.done [#allocation12], 512
        $region72: #{tpu_custom_call.1} parent=47 // pred_fallthru
          _
        %s433 = sand.u32 %s44, 1
        %s434 = scalar_lea.sflag [#allocation3], %s433
        %s435 = sand.u32 %s44, 1
        %s436 = smul.addr %s435, 8
        %s437 = scalar_lea.vmem [#allocation2], %s436
        %p438 = pneg %p57
        %p439 = pneg %p54
        %s440 = sand.u32 %s36, 1
        %s441 = scalar_lea.sflag [#allocation6], %s440
        %s442 = sand.u32 %s70, 1
        %s443 = smul.addr %s442, 8
        %s444 = scalar_lea.vmem [#allocation5], %s443
        %p445 = pneg %p83
        %p446 = pneg %p80
        %s447 = sand.u32 %s36, 1
        %s448 = scalar_lea.sflag [#allocation6], %s447
        %s449 = sand.u32 %s96, 1
        %s450 = smul.addr %s449, 8
        %s451 = scalar_lea.vmem [#allocation7], %s450
        %p452 = pneg %p109
        %p453 = pneg %p106
        %s454 = sand.u32 %s36, 1
        %s455 = scalar_lea.sflag [#allocation9], %s454
        %s456 = sand.u32 %s122, 1
        %s457 = smul.addr %s456, 8
        %s458 = scalar_lea.vmem [#allocation8], %s457
        %p459 = pneg %p135
        %p460 = pneg %p132
        %p461 = pneg %p156
        %p462 = pneg %p153
        %p463 = pneg %p177
        %p464 = pneg %p174
        %p465 = pneg %p198
        %p466 = pneg %p195
        %p467 = pneg %p224
        %p468 = pneg %p221
        %s469 = sand.u32 %s211, 1
        %s470 = scalar_lea.sflag [#allocation4], %s469
        %s471 = sand.u32 %s211, 1
        %s472 = smul.addr %s471, 8
        %s473 = scalar_lea.vmem [#allocation13], %s472
        %p474 = pneg %p250
        %p475 = pneg %p247
        %s476 = sand.u32 %s237, 1
        %s477 = scalar_lea.sflag [#allocation15], %s476
        %s478 = sand.u32 %s237, 1
        %s479 = smul.addr %s478, 8
        %s480 = scalar_lea.vmem [#allocation14], %s479
        %v481 = vld [vmem:[#allocation10] sm:$0xff]
        %v482 = vld [vmem:[#allocation10 + $0x8] sm:$0xff]
        %v483 = vld [vmem:[#allocation10 + $0x10] sm:$0xff]
        %v484 = vld [vmem:[#allocation10 + $0x18] sm:$0xff]
        %v485 = vld [vmem:[#allocation11] sm:$0xff]
        %v486 = vld [vmem:[#allocation11 + $0x8] sm:$0xff]
        %v487 = vld [vmem:[#allocation11 + $0x10] sm:$0xff]
        %v488 = vld [vmem:[#allocation11 + $0x18] sm:$0xff]
        %v489 = vld [vmem:[%s6] sm:$0x1]
        %v490 = vld [vmem:[%s387] sm:$0xff]
        %v491 = vld [vmem:[%s397] sm:$0xff]
        %vm492 = vcmask 261120
        %v494 = vsel %vm492, %v491, 0
        %496 = vmatpush.msra.mxu0 0.0
        %497 = vmatpush.msra.mxu0 0.0
        %498 = vmatpush.msra.mxu0 0.0
        %499 = vmatpush.msra.mxu0 0.0
        %500 = vmatpush.msra.mxu0 0.0
        %501 = vmatpush.msra.mxu0 0.0
        %502 = vmatpush.msra.mxu0 0.0
        %503 = vmatpush.msra.mxu0 0.0
        %504 = vmatpush.msra.mxu0 0.0
        %505 = vmatpush.msra.mxu0 0.0
        %506 = vmatpush.msra.mxu0 0.0
        %507 = vmatpush.msra.mxu0 0.0
        %508 = vmatpush.msra.mxu0 %v488
        %509 = vmatpush.msra.mxu0 %v487
        %510 = vmatpush.msra.mxu0 %v486
        %511 = vmatpush.msra.mxu0 %v485
        %512 = vmatmul.f32.gmra.mxu0 %v494
        %v513 = vpop.f32.mrf.mxu0
        %v514 = vadd.f32 0.0, %v513
        %515 = vdwg.mxu0
        %v517 = vsel %vm492, %v490, 0
        %519 = vmatpush.msra.mxu0 0.0
        %520 = vmatpush.msra.mxu0 0.0
        %521 = vmatpush.msra.mxu0 0.0
        %522 = vmatpush.msra.mxu0 0.0
        %523 = vmatpush.msra.mxu0 0.0
        %524 = vmatpush.msra.mxu0 0.0
        %525 = vmatpush.msra.mxu0 0.0
        %526 = vmatpush.msra.mxu0 0.0
        %527 = vmatpush.msra.mxu0 0.0
        %528 = vmatpush.msra.mxu0 0.0
        %529 = vmatpush.msra.mxu0 0.0
        %530 = vmatpush.msra.mxu0 0.0
        %531 = vmatpush.msra.mxu0 %v484
        %532 = vmatpush.msra.mxu0 %v483
        %533 = vmatpush.msra.mxu0 %v482
        %534 = vmatpush.msra.mxu0 %v481
        %535 = vmatmul.f32.gmra.mxu0 %v517
        %v536 = vpop.f32.mrf.mxu0
        %v537 = vadd.f32 %v514, %v536
        %538 = vdwg.mxu0
        %v540 = vperm.slane %v489, 0
        %v542 = vadd.f32 %v537, %v540
        %v543 = vmax.f32 %v542, 0.0
        %544 = vst.msk [vmem:[%s473] sm:$0xff] %vm492, %v543
        %v545 = vld [vmem:[%s407] sm:$0xff]
        %v546 = vld [vmem:[%s417] sm:$0xff]
        %v548 = vsel %vm492, %v546, 0
        %550 = vmatpush.msra.mxu0 0.0
        %551 = vmatpush.msra.mxu0 0.0
        %552 = vmatpush.msra.mxu0 0.0
        %553 = vmatpush.msra.mxu0 0.0
        %554 = vmatpush.msra.mxu0 0.0
        %555 = vmatpush.msra.mxu0 0.0
        %556 = vmatpush.msra.mxu0 0.0
        %557 = vmatpush.msra.mxu0 0.0
        %558 = vmatpush.msra.mxu0 0.0
        %559 = vmatpush.msra.mxu0 0.0
        %560 = vmatpush.msra.mxu0 0.0
        %561 = vmatpush.msra.mxu0 0.0
        %562 = vmatpush.msra.mxu0 %v488
        %563 = vmatpush.msra.mxu0 %v487
        %564 = vmatpush.msra.mxu0 %v486
        %565 = vmatpush.msra.mxu0 %v485
        %566 = vmatmul.f32.gmra.mxu0 %v548
        %v567 = vpop.f32.mrf.mxu0
        %v568 = vadd.f32 0.0, %v567
        %569 = vdwg.mxu0
        %v571 = vsel %vm492, %v545, 0
        %573 = vmatpush.msra.mxu0 0.0
        %574 = vmatpush.msra.mxu0 0.0
        %575 = vmatpush.msra.mxu0 0.0
        %576 = vmatpush.msra.mxu0 0.0
        %577 = vmatpush.msra.mxu0 0.0
        %578 = vmatpush.msra.mxu0 0.0
        %579 = vmatpush.msra.mxu0 0.0
        %580 = vmatpush.msra.mxu0 0.0
        %581 = vmatpush.msra.mxu0 0.0
        %582 = vmatpush.msra.mxu0 0.0
        %583 = vmatpush.msra.mxu0 0.0
        %584 = vmatpush.msra.mxu0 0.0
        %585 = vmatpush.msra.mxu0 %v484
        %586 = vmatpush.msra.mxu0 %v483
        %587 = vmatpush.msra.mxu0 %v482
        %588 = vmatpush.msra.mxu0 %v481
        %589 = vmatmul.f32.gmra.mxu0 %v571
        %v590 = vpop.f32.mrf.mxu0
        %v591 = vadd.f32 %v568, %v590
        %592 = vdwg.mxu0
        %v593 = vadd.f32 %v591, %v540
        %v594 = vmax.f32 %v593, 0.0
        %595 = vst.msk [vmem:[%s480] sm:$0xff] %vm492, %v594
        %s596 = sand.u32 %s211, 1
        %s597 = scalar_lea.sflag [#allocation4], %s596
        %s598 = sand.u32 %s211, 1
        %s599 = smul.addr %s598, 8
        %s600 = scalar_lea.vmem [#allocation13], %s599
        %s601 = sand.u32 %s237, 1
        %s602 = scalar_lea.sflag [#allocation15], %s601
        %s603 = sand.u32 %s237, 1
        %s604 = smul.addr %s603, 8
        %s605 = scalar_lea.vmem [#allocation14], %s604
        // Predicated region
        $region73: #{tpu_custom_call.1} parent=47 // pred_check
          %p606 = pneg %p221
        $region74: #{tpu_custom_call.1} parent=47 // pred_check_branch
          %608 = sbr.rel (%p606) target = $region76
        $region75: #{tpu_custom_call.1} parent=47 // pred_region
          %610 = vsyncadd %s597, 0
          %s611 = smul.addr %s36, 8
          %s612 = scalar_lea.hbm %s7, %s611
          %s614 = sshll.u32 %s600, 4
          %s615 = int_to_ptr.vmem [resolvable:$true] %s614
          %s616 = sshll.u32 %s612, 4
          %s617 = int_to_ptr.hbm [resolvable:$true] %s616
          %619 = dma.vmem_to_hbm [thread:$0]  %s615, 128, %s617, %s597
        $region76: #{tpu_custom_call.1} parent=47 // pred_fallthru
          _
        // Predicated region
        $region77: #{tpu_custom_call.1} parent=47 // pred_check
          %p620 = pneg %p247
        $region78: #{tpu_custom_call.1} parent=47 // pred_check_branch
          %622 = sbr.rel (%p620) target = $region80
        $region79: #{tpu_custom_call.1} parent=47 // pred_region
          %624 = vsyncadd %s602, 0
          %s625 = smul.addr %s36, 8
          %s626 = scalar_lea.hbm %s8, %s625
          %s628 = sshll.u32 %s605, 4
          %s629 = int_to_ptr.vmem [resolvable:$true] %s628
          %s630 = sshll.u32 %s626, 4
          %s631 = int_to_ptr.hbm [resolvable:$true] %s630
          %633 = dma.vmem_to_hbm [thread:$0]  %s629, 128, %s631, %s602
        $region80: #{tpu_custom_call.1} parent=47 // pred_fallthru
          _
      $region48: #{tpu_custom_call.1} parent=5 // pred_fallthru
        _
      %p634 = scmp.le.s32.totalorder 2, %s31
      // Predicated region
      $region81: #{tpu_custom_call.1} parent=5 // pred_check
        %p635 = pneg %p634
      $region82: #{tpu_custom_call.1} parent=5 // pred_check_branch
        %637 = sbr.rel (%p635) target = $region84
      $region83: #{tpu_custom_call.1} parent=5 // pred_region
        %s638 = ssub.s32 %s31, 2
        // Predicated region
        $region85: #{tpu_custom_call.1} parent=83 // pred_check
          %p639 = pneg %p227
        $region86: #{tpu_custom_call.1} parent=83 // pred_check_branch
          %641 = sbr.rel (%p639) target = $region88
        $region87: #{tpu_custom_call.1} parent=83 // pred_region
          %s642 = sand.u32 %s212, 1
          %s643 = scalar_lea.sflag [#allocation4], %s642
          %s644 = sand.u32 %s212, 1
          %s645 = smul.addr %s644, 8
          %s646 = scalar_lea.vmem [#allocation13], %s645
          %648 = dma.done %s643, 128
        $region88: #{tpu_custom_call.1} parent=83 // pred_fallthru
          _
        // Predicated region
        $region89: #{tpu_custom_call.1} parent=83 // pred_check
          %p649 = pneg %p253
        $region90: #{tpu_custom_call.1} parent=83 // pred_check_branch
          %651 = sbr.rel (%p649) target = $region92
        $region91: #{tpu_custom_call.1} parent=83 // pred_region
          %s652 = sand.u32 %s238, 1
          %s653 = scalar_lea.sflag [#allocation15], %s652
          %s654 = sand.u32 %s238, 1
          %s655 = smul.addr %s654, 8
          %s656 = scalar_lea.vmem [#allocation14], %s655
          %658 = dma.done %s653, 128
        $region92: #{tpu_custom_call.1} parent=83 // pred_fallthru
          _
      $region84: #{tpu_custom_call.1} parent=5 // pred_fallthru
        _
    $region6: #{tpu_custom_call.1} parent=1 // loop_footer
      %s35 = sadd.s32 1, %s31
    $region7: #{tpu_custom_call.1} parent=1 // loop_footer_branch
      %30 = sbr.rel target = $region3
    $region8: #{tpu_custom_call.1} parent=1 // loop_exit
      _
    %659 = vsyncpa [#allocation3], 1
    %s660 = scalar_lea.sflag [#allocation3], 1
    %661 = vsyncpa %s660, 1
    %662 = vsyncpa [#allocation6], 1
    %s663 = scalar_lea.sflag [#allocation6], 1
    %664 = vsyncpa %s663, 1
    %665 = vsyncpa [#allocation9], 1
    %s666 = scalar_lea.sflag [#allocation9], 1
    %667 = vsyncpa %s666, 1
    %668 = vsyncpa [#allocation12], 1
    %669 = vsyncpa [#allocation4], 1
    %s670 = scalar_lea.sflag [#allocation4], 1
    %671 = vsyncpa %s670, 1
    %672 = vsyncpa [#allocation15], 1
    %s673 = scalar_lea.sflag [#allocation15], 1
    %674 = vsyncpa %s673, 1

</llo_original>
